<compile_context>
chip_gen: v5e
topology: v5e:2x2
jax: 0.10.0
libtpu: 0.0.40
codegen_flags: <defaults>
</compile_context>

<pallas_src>
import jax
import jax.numpy as jnp
from jax.experimental import pallas as pl
from jax.experimental.pallas import tpu as pltpu

LANE = 128          # TPU vreg lane width
COLS = 512          # slab width: multiple of 128 -> lane-dense, unmasked stores
TILE_ROWS = 1024    # rows per block (multiple of 8); 1024x512 f32 = 2 MiB / buffer


def _linreg_kernel(wb_ref, x_ref, o_ref):
    # wb_ref: (2,) f32 in SMEM -> [w, b];  x_ref/o_ref: (TILE_ROWS, COLS) VMEM tiles.
    w = wb_ref[0]
    b = wb_ref[1]
    o_ref[...] = x_ref[...] * w + b   # VPU FMA; kernel is HBM-bandwidth bound


def _choose_layout(n):
    """Pick (total_rows, tile_rows) for a lane-dense (total_rows, COLS) slab."""
    rows_needed = -(-n // COLS)                 # ceil
    rows_needed = -(-rows_needed // 8) * 8      # sublane-align (multiple of 8)
    tile_rows = min(TILE_ROWS, rows_needed)     # shrink tile for tiny inputs
    total_rows = -(-rows_needed // tile_rows) * tile_rows
    return total_rows, tile_rows


def linear_regression_forward(x, weight, bias):
    """x: (N, 1) f32, weight: (1, 1) f32, bias: (1,) f32 -> (N, 1) f32."""
    n, f = x.shape
    assert f == 1 and weight.shape == (1, 1) and bias.shape == (1,)

    total_rows, tile_rows = _choose_layout(n)
    padded = total_rows * COLS

    # Lane-dense slab: flatten, zero-pad, reshape to (total_rows, COLS).
    flat = jnp.pad(x.reshape(-1), (0, padded - n))
    x2 = flat.reshape(total_rows, COLS)

    # Pack scalars into one flat SMEM operand.
    wb = jnp.concatenate([weight.reshape(-1), bias.reshape(-1)]).astype(x.dtype)

    grid = (total_rows // tile_rows,)
    out2 = pl.pallas_call(
        _linreg_kernel,
        out_shape=jax.ShapeDtypeStruct((total_rows, COLS), x.dtype),
        grid_spec=pltpu.PrefetchScalarGridSpec(
            num_scalar_prefetch=0,
            grid=grid,
            in_specs=[
                pl.BlockSpec(memory_space=pltpu.SMEM),                  # [w, b]
                pl.BlockSpec((tile_rows, COLS), lambda i: (i, 0)),      # x slab tile
            ],
            out_specs=pl.BlockSpec((tile_rows, COLS), lambda i: (i, 0)),
        ),
        compiler_params=pltpu.CompilerParams(
            dimension_semantics=("parallel",),
        ),
    )(wb, x2)

    # Drop padded tail and restore the (N, 1) module layout.
    return out2.reshape(-1)[:n].reshape(n, 1)


if __name__ == "__main__":
    key = jax.random.PRNGKey(0)
    kx, kw, kb, kx2 = jax.random.split(key, 4)

    # Deterministic parameter init (nn.Linear(1,1) shapes: W=(1,1), b=(1,))
    weight = jax.random.uniform(kw, (1, 1), jnp.float32, minval=-1.0, maxval=1.0)
    bias = jax.random.uniform(kb, (1,), jnp.float32, minval=-1.0, maxval=1.0)

    # Small input consistent with the module: batch of 8 scalar features.
    x = jax.random.normal(kx, (8, 1), jnp.float32)
    y = linear_regression_forward(x, weight, bias)
    y = jax.block_until_ready(y)
    y_ref = x @ weight.T + bias
    assert y.shape == (8, 1)
    assert jnp.allclose(y, y_ref, atol=1e-6), "mismatch vs reference (N=8)"

    # Secondary check: N not a multiple of the slab width -> exercises pad + slice.
    x_big = jax.random.normal(kx2, (1000, 1), jnp.float32)
    y_big = jax.block_until_ready(linear_regression_forward(x_big, weight, bias))
    y_big_ref = x_big @ weight.T + bias
    assert y_big.shape == (1000, 1)
    assert jnp.allclose(y_big, y_big_ref, atol=1e-6), "mismatch vs reference (N=1000)"

    print("KERNEL_OK")
</pallas_src>

<mosaic_0001>
module attributes {stable_mosaic.version = 11 : i64} {
  func.func @_linreg_kernel(%arg0: i32, %arg1: memref<2xf32, #tpu.memory_space<smem>>, %arg2: memref<8x512xf32, #tpu.memory_space<vmem>>, %arg3: memref<8x512xf32, #tpu.memory_space<vmem>>) attributes {dimension_semantics = [#tpu.dimension_semantics<parallel>], iteration_bounds = array<i64: 1>, scalar_prefetch = 0 : i64, scratch_operands = 0 : i64, tpu.core_type = #tpu.core_type<tc>, window_params = [{transform_indices = @transform_0, window_bounds = array<i64: 2>}, {transform_indices = @transform_1, window_bounds = array<i64: 8, 512>}, {transform_indices = @transform_2, window_bounds = array<i64: 8, 512>}]} {
    %c0 = arith.constant 0 : index
    %0 = memref.load %arg1[%c0] : memref<2xf32, #tpu.memory_space<smem>>
    %c1 = arith.constant 1 : index
    %1 = memref.load %arg1[%c1] : memref<2xf32, #tpu.memory_space<smem>>
    %c0_0 = arith.constant 0 : index
    %c0_1 = arith.constant 0 : index
    %2 = vector.load %arg2[%c0_0, %c0_1] : memref<8x512xf32, #tpu.memory_space<vmem>>, vector<8x512xf32>
    %3 = vector.broadcast %0 : f32 to vector<8x512xf32>
    %4 = arith.mulf %2, %3 : vector<8x512xf32>
    %5 = vector.broadcast %1 : f32 to vector<8x512xf32>
    %6 = arith.addf %4, %5 : vector<8x512xf32>
    %c0_2 = arith.constant 0 : index
    %c0_3 = arith.constant 0 : index
    %7 = vector.load %arg3[%c0_2, %c0_3] : memref<8x512xf32, #tpu.memory_space<vmem>>, vector<8x512xf32>
    tpu.vector_store %arg3[%c0_2, %c0_3], %6 {strides = array<i32>} : memref<8x512xf32, #tpu.memory_space<vmem>>, vector<8x512xf32>,
    return
  }
  func.func @transform_0(%arg0: i32) -> i32 {
    %c0_i32 = arith.constant 0 : i32
    %c0_i32_0 = arith.constant 0 : i32
    return %c0_i32 : i32
  }
  func.func @transform_1(%arg0: i32) -> (i32, i32) {
    %c0_i32 = arith.constant 0 : i32
    %c0_i32_0 = arith.constant 0 : i32
    return %arg0, %c0_i32 : i32, i32
  }
  func.func @transform_2(%arg0: i32) -> (i32, i32) {
    %c0_i32 = arith.constant 0 : i32
    %c0_i32_0 = arith.constant 0 : i32
    return %arg0, %c0_i32 : i32, i32
  }
}

</mosaic_0001>

<llo_original>
// kernel: tpu_custom_call.1
$region0: #{tpu_custom_call.1}
  #allocation0 [shape = 'u32[]', space=smem, size = 0x4, offset = 0x4, fixed_abs, tag = 'smem constant byte address 0x4 - core index']
  #allocation1 [shape = 'u32[72,128]{1,0:T(1,128)}', space=vmem, size = 0x9000, scoped, tag = 'internal scratch']
  %s0 = inlined_call_operand.hbm [shape: f32[2], index: 0, kind: input, shape index: {}]
  %s1 = inlined_call_operand.hbm [shape: f32[8,512], index: 1, kind: input, shape index: {}]
  %s2 = inlined_call_operand.hbm [shape: f32[8,512], index: 2, kind: output, shape index: {}]
  %s3 = sld [smem:[#allocation0]]
  $region26: #{tpu_custom_call.1} parent=0
    _
  %s5 = ssub.s32 1, %s3
  %s6 = scalar_select 0, %s5, %s3
  $region1: #{tpu_custom_call.1} parent=0
    #allocation2 [shape = 'u8[512]{0}', space=smem, size = 0x200, scoped, tag = 'input window, operand 0, single buffered']
    #allocation3 [shape = 's32[1]{0}', space=sflag, size = 0x4, scoped, tag = 'scoped memory for tpu_custom_call.1']
    #allocation4 [shape = 's32[1]{0}', space=sflag, size = 0x4, scoped, tag = 'scoped memory for tpu_custom_call.1']
    #allocation5 [shape = 's32[1]{0}', space=sflag, size = 0x4, scoped, tag = 'scoped memory for tpu_custom_call.1']
    #allocation6 [shape = 'u8[16384]{0}', space=vmem, size = 0x4000, scoped, tag = 'input window, operand 1, single buffered']
    #allocation7 [shape = 'u8[16384]{0}', space=vmem, size = 0x4000, scoped, tag = 'output window, operand 0, single buffered']
    %7 = vsyncpa [#allocation5], 0
    %8 = vsyncpa [#allocation3], 0
    %9 = vsyncpa [#allocation4], 0
    // Predicated region
    $region2: #{tpu_custom_call.1} parent=1 // pred_check
      _
    $region3: #{tpu_custom_call.1} parent=1 // pred_check_branch
      %11 = sbr.rel (0) target = $region5
    $region4: #{tpu_custom_call.1} parent=1 // pred_region
      %13 = vsyncadd [#allocation5], 0
      %s15 = sshll.u32 %s0, 4
      %s16 = int_to_ptr.hbm [resolvable:$true] %s15
      %18 = dma.hbm_to_smem %s16, 16, [#allocation2], [#allocation5]
    $region5: #{tpu_custom_call.1} parent=1 // pred_fallthru
      _
    // Predicated region
    $region6: #{tpu_custom_call.1} parent=1 // pred_check
      _
    $region7: #{tpu_custom_call.1} parent=1 // pred_check_branch
      %20 = sbr.rel (0) target = $region9
    $region8: #{tpu_custom_call.1} parent=1 // pred_region
      %22 = vsyncadd [#allocation3], 0
      %s24 = sshll.u32 %s1, 4
      %s25 = int_to_ptr.hbm [resolvable:$true] %s24
      %s26 = sshll.u32 [#allocation6], 4
      %s27 = int_to_ptr.vmem [resolvable:$true] %s26
      %29 = dma.hbm_to_vmem [thread:$0]  %s25, 512, %s27, [#allocation3]
    $region9: #{tpu_custom_call.1} parent=1 // pred_fallthru
      _
    // Predicated region
    $region10: #{tpu_custom_call.1} parent=1 // pred_check
      _
    $region11: #{tpu_custom_call.1} parent=1 // pred_check_branch
      %31 = sbr.rel (0) target = $region13
    $region12: #{tpu_custom_call.1} parent=1 // pred_region
      %33 = dma.done [#allocation5], 16
    $region13: #{tpu_custom_call.1} parent=1 // pred_fallthru
      _
    // Predicated region
    $region14: #{tpu_custom_call.1} parent=1 // pred_check
      _
    $region15: #{tpu_custom_call.1} parent=1 // pred_check_branch
      %35 = sbr.rel (0) target = $region17
    $region16: #{tpu_custom_call.1} parent=1 // pred_region
      %37 = dma.done [#allocation3], 512
    $region17: #{tpu_custom_call.1} parent=1 // pred_fallthru
      _
    %38 = sfence
    %s39 = sld [smem:[#allocation2]]
    %s40 = sld [smem:[#allocation2 + $0x1]]
    %v41 = vld [vmem:[#allocation6] sm:$0xff]
    %v42 = vld [vmem:[#allocation6 + $0x8] sm:$0xff]
    %v43 = vld [vmem:[#allocation6 + $0x10] sm:$0xff]
    %v44 = vld [vmem:[#allocation6 + $0x18] sm:$0xff]
    %v45 = vstv %s39
    %v46 = vmul.f32 %v41, %v45
    %v47 = vmul.f32 %v42, %v45
    %v48 = vmul.f32 %v43, %v45
    %v49 = vmul.f32 %v44, %v45
    %v50 = vstv %s40
    %v51 = vadd.f32 %v46, %v50
    %v52 = vadd.f32 %v47, %v50
    %v53 = vadd.f32 %v48, %v50
    %v54 = vadd.f32 %v49, %v50
    %55 = vst [vmem:[#allocation7] sm:$0xff] %v51
    %56 = vst [vmem:[#allocation7 + $0x8] sm:$0xff] %v52
    %57 = vst [vmem:[#allocation7 + $0x10] sm:$0xff] %v53
    %58 = vst [vmem:[#allocation7 + $0x18] sm:$0xff] %v54
    // Predicated region
    $region18: #{tpu_custom_call.1} parent=1 // pred_check
      _
    $region19: #{tpu_custom_call.1} parent=1 // pred_check_branch
      %60 = sbr.rel (0) target = $region21
    $region20: #{tpu_custom_call.1} parent=1 // pred_region
      %62 = vsyncadd [#allocation4], 0
      %s64 = sshll.u32 [#allocation7], 4
      %s65 = int_to_ptr.vmem [resolvable:$true] %s64
      %s66 = sshll.u32 %s2, 4
      %s67 = int_to_ptr.hbm [resolvable:$true] %s66
      %69 = dma.vmem_to_hbm [thread:$0]  %s65, 512, %s67, [#allocation4]
    $region21: #{tpu_custom_call.1} parent=1 // pred_fallthru
      _
    // Predicated region
    $region22: #{tpu_custom_call.1} parent=1 // pred_check
      _
    $region23: #{tpu_custom_call.1} parent=1 // pred_check_branch
      %71 = sbr.rel (0) target = $region25
    $region24: #{tpu_custom_call.1} parent=1 // pred_region
      %73 = dma.done [#allocation4], 512
    $region25: #{tpu_custom_call.1} parent=1 // pred_fallthru
      _
    %74 = vsyncpa [#allocation3], 1
    %75 = vsyncpa [#allocation4], 1
    %76 = vsyncpa [#allocation5], 1

</llo_original>
